<compile_context>
chip_gen: v7x
topology: tpu7x:2x2x1
jax: 0.10.0
libtpu: 0.0.40
codegen_flags: <defaults>
</compile_context>

<pallas_src>
import jax
import jax.numpy as jnp
from jax.experimental import pallas as pl
from jax.experimental.pallas import tpu as pltpu


# ~4 MiB input tile amortizes the ~0.35 us fixed per-grid-step cost against
# v6e/v7x HBM bandwidth; with double-buffered in + out that is ~16 MiB of
# pipeline buffers, which fits the 32 MiB scoped VMEM we request below
# (physical VMEM: 128 MiB on v5e/v6e, 64 MiB on v7x).
_TARGET_BLOCK_BYTES = 4 << 20
_VMEM_LIMIT_BYTES = 32 << 20
_LANE_CANDIDATES = (512, 256, 128)   # lane-dense widths (multiples of 128)


def _star_relu_kernel(scale_ref, bias_ref, x_ref, o_ref):
    # scale_ref / bias_ref are (1,) f32 scalars in SMEM.
    s = scale_ref[0]
    b = bias_ref[0]
    # f32 compute regardless of input dtype (kernel is HBM-bound; the extra
    # VPU work and converts are hidden under DMA).
    x = x_ref[...].astype(jnp.float32)
    r = jnp.maximum(x, 0.0)
    o_ref[...] = (s * (r * r) + b).astype(o_ref.dtype)


def _star_relu_jnp(x, scale, bias):
    r = jnp.maximum(x.astype(jnp.float32), 0.0)
    return (jnp.float32(scale) * (r * r) + jnp.float32(bias)).astype(x.dtype)


def star_relu(x: jnp.ndarray, scale: float = 1.0, bias: float = 0.0) -> jnp.ndarray:
    """StarReLU: scale * relu(x)**2 + bias, elementwise, any input shape."""
    orig_shape = x.shape
    dtype = x.dtype
    n = x.size
    if n == 0:
        return x

    itemsize = jnp.dtype(dtype).itemsize

    # --- fold into a lane-dense (rows, c) slab, zero-copy when divisible ---
    c = _LANE_CANDIDATES[0]
    for cand in _LANE_CANDIDATES:
        if n % cand == 0:
            c = cand
            break
    n_bulk = (n // c) * c
    rem = n - n_bulk

    flat = x.reshape(-1)

    if n_bulk == 0:
        # Tiny / oddly-sized input: not worth a kernel launch.
        return _star_relu_jnp(flat, scale, bias).reshape(orig_shape)

    rows = n_bulk // c
    x2d = flat[:n_bulk].reshape(rows, c)   # pure metadata op when rem == 0

    # --- row tile: constant byte size per block, 32-row aligned ------------
    tr = max(32, ((_TARGET_BLOCK_BYTES // (c * itemsize)) // 32) * 32)
    # Prefer >= 2 grid steps so v7x's two TensorCores both get work.
    if rows > 32 and tr * 2 > rows:
        tr = max(32, (pl.cdiv(rows, 2) // 32) * 32)
    if tr >= rows:
        tr = rows   # full-extent block is always layout-legal

    grid = (pl.cdiv(rows, tr),)

    scale_arr = jnp.asarray([scale], dtype=jnp.float32)
    bias_arr = jnp.asarray([bias], dtype=jnp.float32)

    cost = pl.CostEstimate(
        flops=3 * n_bulk,
        transcendentals=0,
        bytes_accessed=2 * n_bulk * itemsize,
    )

    out2d = pl.pallas_call(
        _star_relu_kernel,
        out_shape=jax.ShapeDtypeStruct((rows, c), dtype),
        grid=grid,
        in_specs=[
            pl.BlockSpec(memory_space=pltpu.MemorySpace.SMEM),   # scale
            pl.BlockSpec(memory_space=pltpu.MemorySpace.SMEM),   # bias
            pl.BlockSpec((tr, c), lambda i: (i, 0)),             # x tile
        ],
        out_specs=pl.BlockSpec((tr, c), lambda i: (i, 0)),
        compiler_params=pltpu.CompilerParams(
            dimension_semantics=("parallel",),
            vmem_limit_bytes=_VMEM_LIMIT_BYTES,
        ),
        cost_estimate=cost,
    )(scale_arr, bias_arr, x2d)

    if rem == 0:
        return out2d.reshape(orig_shape)

    # Ragged tail (< c elements): trivial jnp expression, then stitch back.
    tail = _star_relu_jnp(flat[n_bulk:], scale, bias)
    return jnp.concatenate([out2d.reshape(-1), tail]).reshape(orig_shape)


if __name__ == "__main__":
    key = jax.random.PRNGKey(0)
    # NCHW-style input consistent with typical usage of the module.
    x = jax.random.normal(key, (2, 4, 16, 16), dtype=jnp.float32) * 2.0

    # Non-default (MetaFormer-style) parameters to exercise the scalar path.
    scale = 0.8944272499
    bias = -0.4472135999

    y = jax.block_until_ready(star_relu(x, scale, bias))
    y_ref = scale * jnp.maximum(x, 0.0) ** 2 + bias
    assert y.shape == x.shape and y.dtype == x.dtype
    assert jnp.allclose(y, y_ref, atol=1e-5, rtol=1e-5), "mismatch vs reference"

    # Module defaults (scale=1.0, bias=0.0).
    y0 = jax.block_until_ready(star_relu(x))
    assert jnp.allclose(y0, jnp.maximum(x, 0.0) ** 2, atol=1e-5, rtol=1e-5)

    # Ragged size (not a multiple of 128) exercises the bulk + tail path.
    xr = jax.random.normal(jax.random.PRNGKey(1), (2, 4, 100), dtype=jnp.float32)
    yr = jax.block_until_ready(star_relu(xr, scale, bias))
    yr_ref = scale * jnp.maximum(xr, 0.0) ** 2 + bias
    assert jnp.allclose(yr, yr_ref, atol=1e-5, rtol=1e-5), "ragged mismatch"

    print("KERNEL_OK")
</pallas_src>

<mosaic_0001>
module attributes {stable_mosaic.version = 11 : i64} {
  func.func @_star_relu_kernel(%arg0: i32, %arg1: memref<1xf32, #tpu.memory_space<smem>>, %arg2: memref<1xf32, #tpu.memory_space<smem>>, %arg3: memref<4x512xf32, #tpu.memory_space<vmem>>, %arg4: memref<4x512xf32, #tpu.memory_space<vmem>>) attributes {dimension_semantics = [#tpu.dimension_semantics<parallel>], iteration_bounds = array<i64: 1>, scalar_prefetch = 0 : i64, scratch_operands = 0 : i64, tpu.core_type = #tpu.core_type<tc>, window_params = [{transform_indices = @transform_0, window_bounds = array<i64: 1>}, {transform_indices = @transform_1, window_bounds = array<i64: 1>}, {transform_indices = @transform_2, window_bounds = array<i64: 4, 512>}, {transform_indices = @transform_3, window_bounds = array<i64: 4, 512>}]} {
    %c0 = arith.constant 0 : index
    %0 = memref.load %arg1[%c0] : memref<1xf32, #tpu.memory_space<smem>>
    %c0_0 = arith.constant 0 : index
    %1 = memref.load %arg2[%c0_0] : memref<1xf32, #tpu.memory_space<smem>>
    %c0_1 = arith.constant 0 : index
    %c0_2 = arith.constant 0 : index
    %2 = vector.load %arg3[%c0_1, %c0_2] : memref<4x512xf32, #tpu.memory_space<vmem>>, vector<4x512xf32>
    %cst = arith.constant 0.000000e+00 : f32
    %3 = vector.broadcast %cst : f32 to vector<4x512xf32>
    %4 = arith.maximumf %2, %3 : vector<4x512xf32>
    %5 = arith.mulf %4, %4 : vector<4x512xf32>
    %6 = vector.broadcast %0 : f32 to vector<4x512xf32>
    %7 = arith.mulf %6, %5 : vector<4x512xf32>
    %8 = vector.broadcast %1 : f32 to vector<4x512xf32>
    %9 = arith.addf %7, %8 : vector<4x512xf32>
    %c0_3 = arith.constant 0 : index
    %c0_4 = arith.constant 0 : index
    %10 = vector.load %arg4[%c0_3, %c0_4] : memref<4x512xf32, #tpu.memory_space<vmem>>, vector<4x512xf32>
    tpu.vector_store %arg4[%c0_3, %c0_4], %9 {strides = array<i32>} : memref<4x512xf32, #tpu.memory_space<vmem>>, vector<4x512xf32>,
    return
  }
  func.func @transform_0(%arg0: i32) -> i32 {
    %c0_i32 = arith.constant 0 : i32
    %c0_i32_0 = arith.constant 0 : i32
    return %c0_i32 : i32
  }
  func.func @transform_1(%arg0: i32) -> i32 {
    %c0_i32 = arith.constant 0 : i32
    %c0_i32_0 = arith.constant 0 : i32
    return %c0_i32 : i32
  }
  func.func @transform_2(%arg0: i32) -> (i32, i32) {
    %c0_i32 = arith.constant 0 : i32
    %c0_i32_0 = arith.constant 0 : i32
    return %arg0, %c0_i32 : i32, i32
  }
  func.func @transform_3(%arg0: i32) -> (i32, i32) {
    %c0_i32 = arith.constant 0 : i32
    %c0_i32_0 = arith.constant 0 : i32
    return %arg0, %c0_i32 : i32, i32
  }
}

</mosaic_0001>

<llo_original>
// kernel: tpu_custom_call.1
$region0: #{tpu_custom_call.1}
  #allocation0 [shape = 'u32[]', space=smem, size = 0x4, offset = 0x4, fixed_abs, tag = 'smem constant byte address 0x4 - core index']
  #allocation1 [shape = 'u32[144,128]{1,0:T(1,128)}', space=vmem, size = 0x12000, scoped, tag = 'internal scratch']
  #allocation2 [shape = 'f32[1]{0:T(128)S(6)}', space=smem, size = 0x200, scoped, tag = 'scoped memory for tpu_custom_call.1']
  #allocation3 [shape = 'f32[1]{0:T(128)S(6)}', space=smem, size = 0x200, scoped, tag = 'scoped memory for tpu_custom_call.1']
  %s0 = inlined_call_operand.<no memory space> [shape: f32[1], index: 0, kind: input, shape index: {}]
  %s1 = inlined_call_operand.<no memory space> [shape: f32[1], index: 1, kind: input, shape index: {}]
  %s2 = inlined_call_operand.hbm [shape: f32[4,512], index: 2, kind: input, shape index: {}]
  %s3 = inlined_call_operand.hbm [shape: f32[4,512], index: 3, kind: output, shape index: {}]
  %s4 = sld [smem:[#allocation0]]
  $region26: #{tpu_custom_call.1} parent=0
    _
  %s6 = ssub.s32 1, %s4
  %s7 = scalar_select 0, %s6, %s4
  %8 = sst [smem:[#allocation2]] %s0
  %9 = sst [smem:[#allocation3]] %s1
  $region1: #{tpu_custom_call.1} parent=0
    #allocation4 [shape = 'u8[8192]{0}', space=vmem, size = 0x2000, scoped, tag = 'input window, operand 2, single buffered']
    #allocation5 [shape = 's32[1]{0}', space=sflag, size = 0x4, scoped, tag = 'scoped memory for tpu_custom_call.1']
    #allocation6 [shape = 's32[1]{0}', space=sflag, size = 0x4, scoped, tag = 'scoped memory for tpu_custom_call.1']
    #allocation7 [shape = 'u8[8192]{0}', space=vmem, size = 0x2000, scoped, tag = 'output window, operand 0, single buffered']
    %10 = vsyncpa [#allocation5], 0
    %11 = vsyncpa [#allocation6], 0
    // Predicated region
    $region2: #{tpu_custom_call.1} parent=1 // pred_check
      _
    $region3: #{tpu_custom_call.1} parent=1 // pred_check_branch
      %13 = sbr.rel (0) target = $region5
    $region4: #{tpu_custom_call.1} parent=1 // pred_region
      _
    $region5: #{tpu_custom_call.1} parent=1 // pred_fallthru
      _
    // Predicated region
    $region6: #{tpu_custom_call.1} parent=1 // pred_check
      _
    $region7: #{tpu_custom_call.1} parent=1 // pred_check_branch
      %15 = sbr.rel (0) target = $region9
    $region8: #{tpu_custom_call.1} parent=1 // pred_region
      _
    $region9: #{tpu_custom_call.1} parent=1 // pred_fallthru
      _
    // Predicated region
    $region10: #{tpu_custom_call.1} parent=1 // pred_check
      _
    $region11: #{tpu_custom_call.1} parent=1 // pred_check_branch
      %17 = sbr.rel (0) target = $region13
    $region12: #{tpu_custom_call.1} parent=1 // pred_region
      %s19 = ssub.s32 256, 256
      %20 = vsyncadd [#allocation5], %s19
      %s22 = sshll.u32 [#allocation4], 4
      %s23 = int_to_ptr.vmem [resolvable:$true] %s22
      %25 = dma.hbm_to_vmem [thread:$0]  %s2, 256, %s23, [#allocation5]
    $region13: #{tpu_custom_call.1} parent=1 // pred_fallthru
      _
    // Predicated region
    $region14: #{tpu_custom_call.1} parent=1 // pred_check
      _
    $region15: #{tpu_custom_call.1} parent=1 // pred_check_branch
      %27 = sbr.rel (0) target = $region17
    $region16: #{tpu_custom_call.1} parent=1 // pred_region
      %28 = dma.done [#allocation5], 256
    $region17: #{tpu_custom_call.1} parent=1 // pred_fallthru
      _
    %s29 = sld [smem:[#allocation2]]
    %s30 = sld [smem:[#allocation3]]
    %v31 = vld [vmem:[#allocation4] sm:$0xff]
    %v32 = vld [vmem:[#allocation4 + $0x8] sm:$0xff]
    %v33 = vmax.f32 %v31, 0.0
    %v34 = vmax.f32 %v32, 0.0
    %v35 = vmul.f32 %v33, %v33
    %v36 = vmul.f32 %v34, %v34
    %v37 = vstv %s29
    %v38 = vmul.f32 %v37, %v35
    %v39 = vmul.f32 %v37, %v36
    %v40 = vstv %s30
    %v41 = vadd.f32 %v38, %v40
    %v42 = vadd.f32 %v39, %v40
    %43 = vst [vmem:[#allocation7] sm:$0xff] %v41
    %44 = vst [vmem:[#allocation7 + $0x8] sm:$0xff] %v42
    // Predicated region
    $region18: #{tpu_custom_call.1} parent=1 // pred_check
      _
    $region19: #{tpu_custom_call.1} parent=1 // pred_check_branch
      %46 = sbr.rel (0) target = $region21
    $region20: #{tpu_custom_call.1} parent=1 // pred_region
      %s48 = ssub.s32 256, 256
      %49 = vsyncadd [#allocation6], %s48
      %s51 = sshll.u32 [#allocation7], 4
      %s52 = int_to_ptr.vmem [resolvable:$true] %s51
      %54 = dma.vmem_to_hbm [thread:$0]  %s52, 256, %s3, [#allocation6]
    $region21: #{tpu_custom_call.1} parent=1 // pred_fallthru
      _
    // Predicated region
    $region22: #{tpu_custom_call.1} parent=1 // pred_check
      _
    $region23: #{tpu_custom_call.1} parent=1 // pred_check_branch
      %56 = sbr.rel (0) target = $region25
    $region24: #{tpu_custom_call.1} parent=1 // pred_region
      %57 = dma.done [#allocation6], 256
    $region25: #{tpu_custom_call.1} parent=1 // pred_fallthru
      _
    %58 = vsyncpa [#allocation5], 1
    %59 = vsyncpa [#allocation6], 1

</llo_original>
